<compile_context>
chip_gen: v5e
topology: v5e:2x2
jax: 0.10.0
libtpu: 0.0.40
codegen_flags: <defaults>
</compile_context>

<pallas_src>
import functools

import jax
import jax.numpy as jnp
from jax.experimental import pallas as pl
from jax.experimental.pallas import tpu as pltpu


def _round_up(n, m):
    return ((n + m - 1) // m) * m


def _choose_row_tile(n_rows, d_model, io_itemsize):
    """Largest row tile whose double-buffered in+out blocks fit a ~8 MiB VMEM
    budget (safe under the default scoped VMEM limit on v5e/v6e/v7x)."""
    budget = 8 * 1024 * 1024
    bytes_per_row = d_model * max(io_itemsize, 4)   # f32 intermediates dominate
    max_rows = budget // (4 * bytes_per_row)        # 2 arrays x 2 buffers
    tile = max(8, min(1024, (max_rows // 8) * 8))   # multiple of 8 sublanes
    return min(tile, _round_up(n_rows, 8))


def _layernorm_kernel(x_ref, gamma_ref, beta_ref, o_ref, *, eps, d_model):
    # x_ref: (row_tile, D) tile of rows; gamma/beta: (1, D) broadcast over rows.
    x = x_ref[...].astype(jnp.float32)
    # mean via sum * (1/D): the divide-by-D is a compile-time constant multiply.
    mean = jnp.sum(x, axis=-1, keepdims=True) * (1.0 / d_model)
    centered = x - mean
    # PyTorch tensor.std() is unbiased (Bessel's correction): divide by D - 1.
    var = jnp.sum(centered * centered, axis=-1, keepdims=True) * (1.0 / (d_model - 1))
    denom = jnp.sqrt(var) + eps
    # EUP approximate reciprocal (separate bundle slot, ~free) + two Newton
    # steps on the VPU to recover f32 accuracy; avoids an expensive vdiv.
    inv = pl.reciprocal(denom, approx=True)
    inv = inv * (2.0 - denom * inv)
    inv = inv * (2.0 - denom * inv)
    gamma = gamma_ref[...].astype(jnp.float32)
    beta = beta_ref[...].astype(jnp.float32)
    o_ref[...] = (gamma * centered * inv + beta).astype(o_ref.dtype)


def pallas_layernorm(x2d, gamma, beta, *, eps=1e-6, row_tile=None):
    """LayerNorm over the last axis of a (rows, d_model) array.

    Matches the reference PyTorch LayerNorm: unbiased std, `std + eps`
    denominator. I/O stays in x2d.dtype (e.g. bf16); compute is f32.
    """
    n_rows, d_model = x2d.shape
    out_dtype = x2d.dtype
    if row_tile is None:
        row_tile = _choose_row_tile(n_rows, d_model, jnp.dtype(out_dtype).itemsize)

    # Ragged row counts: pad rows up to a multiple of the tile (rows are
    # independent; padded rows are sliced off afterwards).
    padded_rows = _round_up(n_rows, row_tile)
    if padded_rows != n_rows:
        x2d = jnp.pad(x2d, ((0, padded_rows - n_rows), (0, 0)))

    gamma2d = gamma.reshape(1, d_model).astype(jnp.float32)
    beta2d = beta.reshape(1, d_model).astype(jnp.float32)

    kernel = functools.partial(_layernorm_kernel, eps=eps, d_model=d_model)

    # TODO(synk): when d_model is not a multiple of 128 (lane-masked stores),
    # pack 128 // d_model rows per lane-dense super-row for full I/O bandwidth.
    y = pl.pallas_call(
        kernel,
        out_shape=jax.ShapeDtypeStruct((padded_rows, d_model), out_dtype),
        grid_spec=pltpu.PrefetchScalarGridSpec(
            num_scalar_prefetch=0,
            grid=(padded_rows // row_tile,),
            in_specs=[
                pl.BlockSpec((row_tile, d_model), lambda i: (i, 0)),
                # Constant index maps: fetched once and revisited, not
                # re-streamed every grid step.
                pl.BlockSpec((1, d_model), lambda i: (0, 0)),
                pl.BlockSpec((1, d_model), lambda i: (0, 0)),
            ],
            out_specs=pl.BlockSpec((row_tile, d_model), lambda i: (i, 0)),
        ),
        compiler_params=pltpu.CompilerParams(
            dimension_semantics=("parallel",),
            vmem_limit_bytes=32 * 1024 * 1024,
        ),
    )(x2d, gamma2d, beta2d)

    if padded_rows != n_rows:
        y = y[:n_rows]
    return y


class EncoderPallas:
    """JAX/Pallas port of Encoder(layer, N)."""

    def __init__(self, d_model, n_layers):
        self.d_model = d_model
        self.n_layers = n_layers
        # LayerNorm params, deterministic init (matches nn.Parameter ones/zeros).
        self.gamma = jnp.ones((d_model,), dtype=jnp.float32)
        self.beta = jnp.zeros((d_model,), dtype=jnp.float32)

    def __call__(self, x, text_features, gcn_query, mask):
        # TODO(synk): the per-layer module `layer(x, text_features, gcn_query, mask)`
        # is not defined in the provided source; the layer stack is an identity
        # passthrough here (once it exists, fuse this norm into its epilogue).
        for _ in range(self.n_layers):
            x = x  # identity stand-in for the undefined EncoderLayer
        B, S, D = x.shape
        y = pallas_layernorm(x.reshape(B * S, D), self.gamma, self.beta)
        return y.reshape(B, S, D)


def _layernorm_ref(x, gamma, beta, eps=1e-6):
    # Pure-JAX reference matching the PyTorch LayerNorm (unbiased std, std+eps).
    mean = jnp.mean(x, axis=-1, keepdims=True)
    std = jnp.sqrt(
        jnp.sum((x - mean) ** 2, axis=-1, keepdims=True) / (x.shape[-1] - 1)
    )
    return gamma * (x - mean) / (std + eps) + beta


if __name__ == "__main__":
    key = jax.random.PRNGKey(0)
    B, S, D = 2, 8, 32          # batch, sequence length, d_model
    n_layers = 2

    k1, k2, k3 = jax.random.split(key, 3)
    x = jax.random.normal(k1, (B, S, D), dtype=jnp.float32)
    text_features = jax.random.normal(k2, (B, S, D), dtype=jnp.float32)
    gcn_query = jax.random.normal(k3, (B, S, D), dtype=jnp.float32)
    mask = jnp.ones((B, 1, S), dtype=jnp.float32)

    enc = EncoderPallas(d_model=D, n_layers=n_layers)
    out = jax.block_until_ready(enc(x, text_features, gcn_query, mask))

    ref = _layernorm_ref(x, enc.gamma, enc.beta)
    assert out.shape == (B, S, D)
    assert jnp.allclose(out, ref, atol=1e-4, rtol=1e-4), "f32 mismatch vs reference"

    # bf16 I/O path + ragged row count (exercises the padded tail handling).
    S2 = 7
    xb = jax.random.normal(k3, (B, S2, D), dtype=jnp.float32).astype(jnp.bfloat16)
    out_b = pallas_layernorm(xb.reshape(B * S2, D), enc.gamma, enc.beta)
    out_b = jax.block_until_ready(out_b).reshape(B, S2, D)
    ref_b = _layernorm_ref(xb.astype(jnp.float32), enc.gamma, enc.beta)
    assert out_b.dtype == jnp.bfloat16
    assert jnp.allclose(out_b.astype(jnp.float32), ref_b, atol=5e-2, rtol=5e-2), \
        "bf16 mismatch vs reference"

    print("KERNEL_OK")
</pallas_src>

<mosaic_0001>
module attributes {stable_mosaic.version = 11 : i64} {
  func.func @_layernorm_kernel(%arg0: i32, %arg1: memref<16x32xf32, #tpu.memory_space<vmem>>, %arg2: memref<1x32xf32, #tpu.memory_space<vmem>>, %arg3: memref<1x32xf32, #tpu.memory_space<vmem>>, %arg4: memref<16x32xf32, #tpu.memory_space<vmem>>) attributes {dimension_semantics = [#tpu.dimension_semantics<parallel>], iteration_bounds = array<i64: 1>, scalar_prefetch = 0 : i64, scratch_operands = 0 : i64, tpu.core_type = #tpu.core_type<tc>, window_params = [{transform_indices = @transform_0, window_bounds = array<i64: 16, 32>}, {pipeline_mode = #tpu.pipeline_mode<synchronous>, transform_indices = @transform_1, window_bounds = array<i64: 1, 32>}, {pipeline_mode = #tpu.pipeline_mode<synchronous>, transform_indices = @transform_2, window_bounds = array<i64: 1, 32>}, {transform_indices = @transform_3, window_bounds = array<i64: 16, 32>}]} {
    %c0 = arith.constant 0 : index
    %c0_0 = arith.constant 0 : index
    %0 = vector.load %arg1[%c0, %c0_0] : memref<16x32xf32, #tpu.memory_space<vmem>>, vector<16x32xf32>
    %cst = arith.constant dense<0.000000e+00> : vector<16xf32>
    %1 = vector.multi_reduction <add>, %0, %cst [1] : vector<16x32xf32> to vector<16xf32>
    %2 = vector.shape_cast %1 : vector<16xf32> to vector<16x1xf32>
    %cst_1 = arith.constant 3.125000e-02 : f32
    %3 = vector.broadcast %cst_1 : f32 to vector<16x1xf32>
    %4 = arith.mulf %2, %3 : vector<16x1xf32>
    %5 = vector.broadcast %4 : vector<16x1xf32> to vector<16x32xf32>
    %6 = arith.subf %0, %5 : vector<16x32xf32>
    %7 = arith.mulf %6, %6 : vector<16x32xf32>
    %cst_2 = arith.constant dense<0.000000e+00> : vector<16xf32>
    %8 = vector.multi_reduction <add>, %7, %cst_2 [1] : vector<16x32xf32> to vector<16xf32>
    %9 = vector.shape_cast %8 : vector<16xf32> to vector<16x1xf32>
    %cst_3 = arith.constant 0.0322580636 : f32
    %10 = vector.broadcast %cst_3 : f32 to vector<16x1xf32>
    %11 = arith.mulf %9, %10 : vector<16x1xf32>
    %12 = math.sqrt %11 : vector<16x1xf32>
    %cst_4 = arith.constant 9.99999997E-7 : f32
    %13 = vector.broadcast %cst_4 : f32 to vector<16x1xf32>
    %14 = arith.addf %12, %13 : vector<16x1xf32>
    %15 = tpu.reciprocal %14 {approx = true} : vector<16x1xf32> -> vector<16x1xf32>
    %16 = arith.mulf %14, %15 : vector<16x1xf32>
    %cst_5 = arith.constant 2.000000e+00 : f32
    %17 = vector.broadcast %cst_5 : f32 to vector<16x1xf32>
    %18 = arith.subf %17, %16 : vector<16x1xf32>
    %19 = arith.mulf %15, %18 : vector<16x1xf32>
    %20 = arith.mulf %14, %19 : vector<16x1xf32>
    %cst_6 = arith.constant 2.000000e+00 : f32
    %21 = vector.broadcast %cst_6 : f32 to vector<16x1xf32>
    %22 = arith.subf %21, %20 : vector<16x1xf32>
    %23 = arith.mulf %19, %22 : vector<16x1xf32>
    %c0_7 = arith.constant 0 : index
    %c0_8 = arith.constant 0 : index
    %24 = vector.load %arg2[%c0_7, %c0_8] : memref<1x32xf32, #tpu.memory_space<vmem>>, vector<1x32xf32>
    %c0_9 = arith.constant 0 : index
    %c0_10 = arith.constant 0 : index
    %25 = vector.load %arg3[%c0_9, %c0_10] : memref<1x32xf32, #tpu.memory_space<vmem>>, vector<1x32xf32>
    %26 = vector.broadcast %24 : vector<1x32xf32> to vector<16x32xf32>
    %27 = arith.mulf %26, %6 : vector<16x32xf32>
    %28 = vector.broadcast %23 : vector<16x1xf32> to vector<16x32xf32>
    %29 = arith.mulf %27, %28 : vector<16x32xf32>
    %30 = vector.broadcast %25 : vector<1x32xf32> to vector<16x32xf32>
    %31 = arith.addf %29, %30 : vector<16x32xf32>
    %c0_11 = arith.constant 0 : index
    %c0_12 = arith.constant 0 : index
    %32 = vector.load %arg4[%c0_11, %c0_12] : memref<16x32xf32, #tpu.memory_space<vmem>>, vector<16x32xf32>
    tpu.vector_store %arg4[%c0_11, %c0_12], %31 {strides = array<i32>} : memref<16x32xf32, #tpu.memory_space<vmem>>, vector<16x32xf32>,
    return
  }
  func.func @transform_0(%arg0: i32) -> (i32, i32) {
    %c0_i32 = arith.constant 0 : i32
    %c0_i32_0 = arith.constant 0 : i32
    return %arg0, %c0_i32 : i32, i32
  }
  func.func @transform_1(%arg0: i32) -> (i32, i32) {
    %c0_i32 = arith.constant 0 : i32
    %c0_i32_0 = arith.constant 0 : i32
    %c0_i32_1 = arith.constant 0 : i32
    return %c0_i32, %c0_i32_0 : i32, i32
  }
  func.func @transform_2(%arg0: i32) -> (i32, i32) {
    %c0_i32 = arith.constant 0 : i32
    %c0_i32_0 = arith.constant 0 : i32
    %c0_i32_1 = arith.constant 0 : i32
    return %c0_i32, %c0_i32_0 : i32, i32
  }
  func.func @transform_3(%arg0: i32) -> (i32, i32) {
    %c0_i32 = arith.constant 0 : i32
    %c0_i32_0 = arith.constant 0 : i32
    return %arg0, %c0_i32 : i32, i32
  }
}

</mosaic_0001>

<llo_original>
// kernel: tpu_custom_call.1
$region0: #{tpu_custom_call.1}
  #allocation0 [shape = 'u32[]', space=smem, size = 0x4, offset = 0x4, fixed_abs, tag = 'smem constant byte address 0x4 - core index']
  #allocation1 [shape = 'u32[72,128]{1,0:T(1,128)}', space=vmem, size = 0x9000, scoped, tag = 'internal scratch']
  %s0 = inlined_call_operand.hbm [shape: f32[16,32], index: 0, kind: input, shape index: {}]
  %s1 = inlined_call_operand.hbm [shape: f32[1,32], index: 1, kind: input, shape index: {}]
  %s2 = inlined_call_operand.vmem [shape: f32[1,32], index: 2, kind: input, shape index: {}]
  %s3 = inlined_call_operand.hbm [shape: f32[16,32], index: 3, kind: output, shape index: {}]
  %s4 = sld [smem:[#allocation0]]
  $region30: #{tpu_custom_call.1} parent=0
    _
  %s6 = ssub.s32 1, %s4
  %s7 = scalar_select 0, %s6, %s4
  $region1: #{tpu_custom_call.1} parent=0
    #allocation2 [shape = 'u8[8192]{0}', space=vmem, size = 0x2000, scoped, tag = 'input window, operand 0, single buffered']
    #allocation3 [shape = 's32[1]{0}', space=sflag, size = 0x4, scoped, tag = 'scoped memory for tpu_custom_call.1']
    #allocation4 [shape = 's32[1]{0}', space=sflag, size = 0x4, scoped, tag = 'scoped memory for tpu_custom_call.1']
    #allocation5 [shape = 'u8[512]{0}', space=vmem, size = 0x400, scoped, tag = 'input window, operand 1, single buffered']
    #allocation6 [shape = 's32[1]{0}', space=sflag, size = 0x4, scoped, tag = 'scoped memory for tpu_custom_call.1']
    #allocation7 [shape = 'u8[8192]{0}', space=vmem, size = 0x2000, scoped, tag = 'output window, operand 0, single buffered']
    %8 = vsyncpa [#allocation3], 0
    %9 = vsyncpa [#allocation6], 0
    %10 = vsyncpa [#allocation4], 0
    // Predicated region
    $region2: #{tpu_custom_call.1} parent=1 // pred_check
      _
    $region3: #{tpu_custom_call.1} parent=1 // pred_check_branch
      %12 = sbr.rel (0) target = $region5
    $region4: #{tpu_custom_call.1} parent=1 // pred_region
      %14 = vsyncadd [#allocation3], 0
      %s15 = sshll.u32 %s0, 4
      %s16 = int_to_ptr.hbm [resolvable:$true] %s15
      %s17 = sshll.u32 [#allocation2], 4
      %s18 = int_to_ptr.vmem [resolvable:$true] %s17
      %23 = dma.hbm_to_vmem [thread:$0]  %s16, 256, %s18, [#allocation3], 128, 128, 8
    $region5: #{tpu_custom_call.1} parent=1 // pred_fallthru
      _
    // Predicated region
    $region6: #{tpu_custom_call.1} parent=1 // pred_check
      _
    $region7: #{tpu_custom_call.1} parent=1 // pred_check_branch
      %25 = sbr.rel (0) target = $region9
    $region8: #{tpu_custom_call.1} parent=1 // pred_region
      %27 = vsyncadd [#allocation6], 0
      %s29 = sshll.u32 %s1, 4
      %s30 = int_to_ptr.hbm [resolvable:$true] %s29
      %s31 = sshll.u32 [#allocation5], 4
      %s32 = int_to_ptr.vmem [resolvable:$true] %s31
      %34 = dma.hbm_to_vmem [thread:$0]  %s30, 16, %s32, [#allocation6]
    $region9: #{tpu_custom_call.1} parent=1 // pred_fallthru
      _
    // Predicated region
    $region10: #{tpu_custom_call.1} parent=1 // pred_check
      _
    $region11: #{tpu_custom_call.1} parent=1 // pred_check_branch
      %36 = sbr.rel (0) target = $region13
    $region12: #{tpu_custom_call.1} parent=1 // pred_region
      _
    $region13: #{tpu_custom_call.1} parent=1 // pred_fallthru
      _
    // Predicated region
    $region14: #{tpu_custom_call.1} parent=1 // pred_check
      _
    $region15: #{tpu_custom_call.1} parent=1 // pred_check_branch
      %38 = sbr.rel (0) target = $region17
    $region16: #{tpu_custom_call.1} parent=1 // pred_region
      %40 = dma.done [#allocation3], 256
    $region17: #{tpu_custom_call.1} parent=1 // pred_fallthru
      _
    // Predicated region
    $region18: #{tpu_custom_call.1} parent=1 // pred_check
      _
    $region19: #{tpu_custom_call.1} parent=1 // pred_check_branch
      %42 = sbr.rel (0) target = $region21
    $region20: #{tpu_custom_call.1} parent=1 // pred_region
      %44 = dma.done [#allocation6], 16
    $region21: #{tpu_custom_call.1} parent=1 // pred_fallthru
      _
    %v45 = vld [vmem:[#allocation2] sm:$0xff]
    %v46 = vld [vmem:[#allocation2 + $0x8] sm:$0xff]
    %vm47 = vcmask 261120
    %v48 = vsel %vm47, %v45, 0.0
    %49 = vadd.xlane.f32.xlu0 %v48
    %v50 = vpop.xlane.xlu0 %49
    %v51 = vsel %vm47, %v46, 0.0
    %52 = vadd.xlane.f32.xlu0 %v51
    %v53 = vpop.xlane.xlu0 %52
    %v54 = vmul.f32 %v50, 0.03125
    %v55 = vmul.f32 %v53, 0.03125
    %v56 = vsub.f32 %v45, %v54
    %v57 = vsub.f32 %v46, %v55
    %v58 = vmul.f32 %v56, %v56
    %v59 = vmul.f32 %v57, %v57
    %v60 = vsel %vm47, %v58, 0.0
    %61 = vadd.xlane.f32.xlu0 %v60
    %v62 = vpop.xlane.xlu0 %61
    %v63 = vsel %vm47, %v59, 0.0
    %64 = vadd.xlane.f32.xlu0 %v63
    %v65 = vpop.xlane.xlu0 %64
    %v66 = vmul.f32 %v62, 0.032258064
    %v67 = vmul.f32 %v65, 0.032258064
    %v68 = vrsqrt.pop %v66
    %v69 = vmul.f32 %v68, %v66
    %v70 = vmul.f32 %v69, %v68
    %v71 = vmul.f32 0.5, %v70
    %v72 = vsub.f32 1.5, %v71
    %v73 = vmul.f32 %v68, %v72
    %v74 = vmul.f32 %v66, %v73
    %vm75 = vcmp.eq.f32.partialorder %v66, inf
    %v76 = vsel %vm75, %v66, %v74
    %vm77 = vcmp.eq.f32.partialorder %v66, 0.0
    %v78 = vand.u32 %v66, 2147483648
    %v79 = vsel %vm77, %v78, %v76
    %v80 = vrsqrt.pop %v67
    %v81 = vmul.f32 %v80, %v67
    %v82 = vmul.f32 %v81, %v80
    %v83 = vmul.f32 0.5, %v82
    %v84 = vsub.f32 1.5, %v83
    %v85 = vmul.f32 %v80, %v84
    %v86 = vmul.f32 %v67, %v85
    %vm87 = vcmp.eq.f32.partialorder %v67, inf
    %v88 = vsel %vm87, %v67, %v86
    %vm89 = vcmp.eq.f32.partialorder %v67, 0.0
    %v90 = vand.u32 %v67, 2147483648
    %v91 = vsel %vm89, %v90, %v88
    %v92 = vadd.f32 %v79, 1e-06
    %v93 = vadd.f32 %v91, 1e-06
    %v94 = vrcp.pop %v92
    %v95 = vrcp.pop %v93
    %v96 = vmul.f32 %v92, %v94
    %v97 = vmul.f32 %v93, %v95
    %v98 = vsub.f32 2.0, %v96
    %v99 = vsub.f32 2.0, %v97
    %v100 = vmul.f32 %v94, %v98
    %v101 = vmul.f32 %v95, %v99
    %v102 = vmul.f32 %v92, %v100
    %v103 = vmul.f32 %v93, %v101
    %v104 = vsub.f32 2.0, %v102
    %v105 = vsub.f32 2.0, %v103
    %v106 = vmul.f32 %v100, %v104
    %v107 = vmul.f32 %v101, %v105
    %v108 = vld [vmem:[#allocation5] sm:$0x1]
    %v109 = vld [vmem:[%s2] sm:$0x1]
    %v111 = vperm.slane %v108, 0
    %v113 = vmul.f32 %v111, %v56
    %v114 = vmul.f32 %v111, %v57
    %v115 = vmul.f32 %v113, %v106
    %v116 = vmul.f32 %v114, %v107
    %v118 = vperm.slane %v109, 0
    %v120 = vadd.f32 %v115, %v118
    %v121 = vadd.f32 %v116, %v118
    %122 = vst.msk [vmem:[#allocation7] sm:$0xff] %vm47, %v120
    %123 = vst.msk [vmem:[#allocation7 + $0x8] sm:$0xff] %vm47, %v121
    // Predicated region
    $region22: #{tpu_custom_call.1} parent=1 // pred_check
      _
    $region23: #{tpu_custom_call.1} parent=1 // pred_check_branch
      %125 = sbr.rel (0) target = $region25
    $region24: #{tpu_custom_call.1} parent=1 // pred_region
      %127 = vsyncadd [#allocation4], 0
      %s128 = sshll.u32 [#allocation7], 4
      %s129 = int_to_ptr.vmem [resolvable:$true] %s128
      %s130 = sshll.u32 %s3, 4
      %s131 = int_to_ptr.hbm [resolvable:$true] %s130
      %136 = dma.vmem_to_hbm [thread:$0]  %s129, 256, %s131, [#allocation4], 128, 128, 8
    $region25: #{tpu_custom_call.1} parent=1 // pred_fallthru
      _
    // Predicated region
    $region26: #{tpu_custom_call.1} parent=1 // pred_check
      _
    $region27: #{tpu_custom_call.1} parent=1 // pred_check_branch
      %138 = sbr.rel (0) target = $region29
    $region28: #{tpu_custom_call.1} parent=1 // pred_region
      %140 = dma.done [#allocation4], 256
    $region29: #{tpu_custom_call.1} parent=1 // pred_fallthru
      _
    %141 = vsyncpa [#allocation3], 1
    %142 = vsyncpa [#allocation6], 1
    %143 = vsyncpa [#allocation4], 1

</llo_original>
